<compile_context>
chip_gen: v5e
topology: v5e:2x2
jax: 0.10.0
libtpu: 0.0.40
codegen_flags: <defaults>
</compile_context>

<pallas_src>
import functools

import jax
import jax.numpy as jnp
from jax.experimental import pallas as pl
from jax.experimental.pallas import tpu as pltpu


def _adversary_kernel(q_ref, w_ref, mb_ref, logit_ref, *, matmul_dtype):
    w = w_ref[...]                                   # (dim, tk), W.dtype
    q = q_ref[...]                                   # (n,  dim), q.dtype

    # MXU matmul on the *raw* weights: no data dependence on the normalization,
    # so the systolic array starts immediately. Optional bf16 operands halve the
    # vregs holding q/w and avoid the multi-pass f32 MXU path.
    raw = jnp.dot(q.astype(matmul_dtype), w.astype(matmul_dtype),
                  preferred_element_type=jnp.float32)            # (n, tk) f32

    # Column-wise L2 norm over `dim` (PyTorch F.normalize(dim=0), eps=1e-12):
    #   x / max(||x||, eps)  ==  x * rsqrt(max(||x||^2, eps^2))
    wf = w.astype(jnp.float32)
    sq = jnp.sum(wf * wf, axis=0, keepdims=True)                 # (1, tk)
    inv = jax.lax.rsqrt(jnp.maximum(sq, 1e-24))                  # EUP rsqrt

    mb_ref[...] = (wf * inv).astype(mb_ref.dtype)                # normalized bank
    logit_ref[...] = (raw * inv).astype(logit_ref.dtype)         # q @ normalize(W)


def _round_up(x, m):
    return (x + m - 1) // m * m


def _select_tile_k(n, dim, bank_size, w_bytes, out_bytes, q_bytes, vmem_budget):
    """Pick a lane-dense bank tile from a VMEM budget, keeping >=2 grid steps."""
    if bank_size <= 128:
        # Tiny bank: a single full-extent block is always legal.
        return bank_size
    # Per-step bytes that scale with tk (all blocks double-buffered by Pallas).
    per_col = 2 * (w_bytes * dim + out_bytes * dim + out_bytes * n)
    resident_q = 2 * q_bytes * n * dim
    avail = max(vmem_budget - resident_q, per_col * 128)
    tk = max(128, (avail // per_col) // 128 * 128)
    # Keep the grid >= 2 steps: preserves DMA/compute overlap and lets v7x shard
    # the bank axis across its two TensorCores.
    tk = min(tk, max(128, _round_up(pl.cdiv(bank_size, 2), 128)))
    # Never exceed the (128-padded) bank.
    tk = min(tk, _round_up(bank_size, 128))
    return int(tk)


def adversary_negatives_forward(q, W, *, matmul_dtype=None, out_dtype=jnp.float32,
                                vmem_budget_bytes=None):
    """Returns (memory_bank, W, logit) exactly like the PyTorch module.

    matmul_dtype: dtype for the MXU operands (default: q.dtype, i.e. f32 for
        exact module semantics; jnp.bfloat16 for bandwidth-bound throughput).
    out_dtype: dtype of memory_bank / logit outputs (bf16 halves write traffic
        if downstream tolerates it).
    vmem_budget_bytes: per-step VMEM budget used to size the bank tile; derived
        from the chip's VMEM capacity when None.
    """
    n, dim = q.shape
    dim_w, bank_size = W.shape
    assert dim == dim_w
    if matmul_dtype is None:
        matmul_dtype = q.dtype

    # VMEM-budget-aware tiling + explicit vmem limit (v5e/v6e: 128 MiB physical,
    # v7x: 64 MiB physical / 32 MiB default scoped — sizing must respect v7x).
    try:
        info = pltpu.get_tpu_info()
        vmem_cap = int(getattr(info, "vmem_capacity_bytes", 64 * 1024 * 1024))
    except Exception:
        vmem_cap = 64 * 1024 * 1024     # conservative: v7x per-TC figure
    if vmem_budget_bytes is None:
        vmem_budget_bytes = int(vmem_cap * 0.55)
    vmem_limit_bytes = int(vmem_cap * 0.75)

    w_bytes = jnp.dtype(W.dtype).itemsize
    q_bytes = jnp.dtype(q.dtype).itemsize
    out_bytes = jnp.dtype(out_dtype).itemsize
    tk = _select_tile_k(n, dim, bank_size, w_bytes, out_bytes, q_bytes,
                        vmem_budget_bytes)
    num_k = pl.cdiv(bank_size, tk)

    cost = pl.CostEstimate(
        flops=2 * n * dim * bank_size + 3 * dim * bank_size,
        transcendentals=bank_size,
        bytes_accessed=(w_bytes * dim * bank_size + q_bytes * n * dim
                        + out_bytes * (dim * bank_size + n * bank_size)),
    )

    kernel = functools.partial(_adversary_kernel, matmul_dtype=matmul_dtype)

    mb, logit = pl.pallas_call(
        kernel,
        out_shape=(
            jax.ShapeDtypeStruct((dim, bank_size), out_dtype),
            jax.ShapeDtypeStruct((n, bank_size), out_dtype),
        ),
        grid=(num_k,),
        in_specs=[
            # q block index is constant -> stays resident in VMEM, DMA'd once.
            pl.BlockSpec((n, dim), lambda k: (0, 0)),
            pl.BlockSpec((dim, tk), lambda k: (0, k)),
        ],
        out_specs=(
            pl.BlockSpec((dim, tk), lambda k: (0, k)),
            pl.BlockSpec((n, tk), lambda k: (0, k)),
        ),
        compiler_params=pltpu.CompilerParams(
            dimension_semantics=("parallel",),      # independent bank slabs
            vmem_limit_bytes=vmem_limit_bytes,
        ),
        cost_estimate=cost,
    )(q, W)
    return mb, W, logit


def xavier_uniform(key, shape, dtype=jnp.float32):
    # PyTorch xavier_uniform_ on a 2-D tensor: bound = sqrt(6 / (fan_in + fan_out))
    fan_out, fan_in = shape
    bound = (6.0 / (fan_in + fan_out)) ** 0.5
    return jax.random.uniform(key, shape, dtype=dtype, minval=-bound, maxval=bound)


if __name__ == "__main__":
    # Small shapes consistent with the module; bank_size chosen so the K-tiling
    # path (>=2 grid steps) is actually exercised.
    bank_size, dim, n = 1024, 64, 16

    key = jax.random.PRNGKey(0)
    kw, kq = jax.random.split(key)
    W = xavier_uniform(kw, (dim, bank_size))            # nn.Parameter(dim, bank_size)
    q = jax.random.normal(kq, (n, dim), dtype=jnp.float32)

    # Plain-JAX reference (mirrors F.normalize(dim=0) with eps=1e-12).
    col_norm = jnp.sqrt(jnp.sum(W * W, axis=0, keepdims=True))
    mb_ref = W / jnp.maximum(col_norm, 1e-12)
    logit_ref = q @ mb_ref

    # 1) Exact-semantics path (f32 matmul, f32 outputs).
    mb, W_out, logit = adversary_negatives_forward(q, W)
    jax.block_until_ready((mb, W_out, logit))
    assert jnp.allclose(mb, mb_ref, atol=1e-5, rtol=1e-5)
    assert jnp.allclose(logit, logit_ref, atol=1e-4, rtol=1e-4)
    assert jnp.array_equal(W_out, W)

    # 2) Bandwidth-optimized path (bf16 MXU operands, f32 accumulate) -> looser tol.
    mb_b, _, logit_b = adversary_negatives_forward(q, W, matmul_dtype=jnp.bfloat16)
    jax.block_until_ready((mb_b, logit_b))
    assert jnp.allclose(mb_b, mb_ref, atol=1e-5, rtol=1e-5)
    assert jnp.allclose(logit_b, logit_ref, atol=2e-2, rtol=2e-2)

    print("KERNEL_OK")
</pallas_src>

<mosaic_0001>
module attributes {stable_mosaic.version = 11 : i64} {
  func.func @_adversary_kernel(%arg0: i32, %arg1: memref<16x64xf32, #tpu.memory_space<vmem>>, %arg2: memref<64x512xf32, #tpu.memory_space<vmem>>, %arg3: memref<64x512xf32, #tpu.memory_space<vmem>>, %arg4: memref<16x512xf32, #tpu.memory_space<vmem>>) attributes {dimension_semantics = [#tpu.dimension_semantics<parallel>], iteration_bounds = array<i64: 2>, scalar_prefetch = 0 : i64, scratch_operands = 0 : i64, tpu.core_type = #tpu.core_type<tc>, window_params = [{pipeline_mode = #tpu.pipeline_mode<synchronous>, transform_indices = @transform_0, window_bounds = array<i64: 16, 64>}, {transform_indices = @transform_1, window_bounds = array<i64: 64, 512>}, {transform_indices = @transform_2, window_bounds = array<i64: 64, 512>}, {transform_indices = @transform_3, window_bounds = array<i64: 16, 512>}]} {
    %c0 = arith.constant 0 : index
    %c0_0 = arith.constant 0 : index
    %0 = vector.load %arg2[%c0, %c0_0] : memref<64x512xf32, #tpu.memory_space<vmem>>, vector<64x512xf32>
    %c0_1 = arith.constant 0 : index
    %c0_2 = arith.constant 0 : index
    %1 = vector.load %arg1[%c0_1, %c0_2] : memref<16x64xf32, #tpu.memory_space<vmem>>, vector<16x64xf32>
    %cst = arith.constant dense<0.000000e+00> : vector<16x512xf32>
    %2 = tpu.matmul %1, %0, %cst {dimension_numbers = #tpu.dot_dimension_numbers<[1], [0], [0], [1], [0, 0, 1, 1], [], []>} : vector<16x64xf32>, vector<64x512xf32>, vector<16x512xf32> -> vector<16x512xf32>
    %3 = arith.mulf %0, %0 : vector<64x512xf32>
    %cst_3 = arith.constant dense<0.000000e+00> : vector<512xf32>
    %4 = vector.multi_reduction <add>, %3, %cst_3 [0] : vector<64x512xf32> to vector<512xf32>
    %5 = vector.shape_cast %4 : vector<512xf32> to vector<1x512xf32>
    %cst_4 = arith.constant 1.000000e-24 : f32
    %6 = vector.broadcast %cst_4 : f32 to vector<1x512xf32>
    %7 = arith.maximumf %5, %6 : vector<1x512xf32>
    %8 = math.rsqrt %7 : vector<1x512xf32>
    %9 = vector.broadcast %8 : vector<1x512xf32> to vector<64x512xf32>
    %10 = arith.mulf %0, %9 : vector<64x512xf32>
    %c0_5 = arith.constant 0 : index
    %c0_6 = arith.constant 0 : index
    %11 = vector.load %arg3[%c0_5, %c0_6] : memref<64x512xf32, #tpu.memory_space<vmem>>, vector<64x512xf32>
    tpu.vector_store %arg3[%c0_5, %c0_6], %10 {strides = array<i32>} : memref<64x512xf32, #tpu.memory_space<vmem>>, vector<64x512xf32>,
    %12 = vector.broadcast %8 : vector<1x512xf32> to vector<16x512xf32>
    %13 = arith.mulf %2, %12 : vector<16x512xf32>
    %c0_7 = arith.constant 0 : index
    %c0_8 = arith.constant 0 : index
    %14 = vector.load %arg4[%c0_7, %c0_8] : memref<16x512xf32, #tpu.memory_space<vmem>>, vector<16x512xf32>
    tpu.vector_store %arg4[%c0_7, %c0_8], %13 {strides = array<i32>} : memref<16x512xf32, #tpu.memory_space<vmem>>, vector<16x512xf32>,
    return
  }
  func.func @transform_0(%arg0: i32) -> (i32, i32) {
    %c0_i32 = arith.constant 0 : i32
    %c0_i32_0 = arith.constant 0 : i32
    %c0_i32_1 = arith.constant 0 : i32
    return %c0_i32, %c0_i32_0 : i32, i32
  }
  func.func @transform_1(%arg0: i32) -> (i32, i32) {
    %c0_i32 = arith.constant 0 : i32
    %c0_i32_0 = arith.constant 0 : i32
    return %c0_i32, %arg0 : i32, i32
  }
  func.func @transform_2(%arg0: i32) -> (i32, i32) {
    %c0_i32 = arith.constant 0 : i32
    %c0_i32_0 = arith.constant 0 : i32
    return %c0_i32, %arg0 : i32, i32
  }
  func.func @transform_3(%arg0: i32) -> (i32, i32) {
    %c0_i32 = arith.constant 0 : i32
    %c0_i32_0 = arith.constant 0 : i32
    return %c0_i32, %arg0 : i32, i32
  }
}

</mosaic_0001>

<llo_original>
// kernel: tpu_custom_call.1
$region0: #{tpu_custom_call.1}
  #allocation0 [shape = 'u32[]', space=smem, size = 0x4, offset = 0x4, fixed_abs, tag = 'smem constant byte address 0x4 - core index']
  #allocation1 [shape = 'u32[72,128]{1,0:T(1,128)}', space=vmem, size = 0x9000, scoped, tag = 'internal scratch']
  %s0 = inlined_call_operand.hbm [shape: f32[16,64], index: 0, kind: input, shape index: {}]
  %s1 = inlined_call_operand.hbm [shape: f32[64,1024], index: 1, kind: input, shape index: {}]
  %s2 = inlined_call_operand.hbm [shape: f32[64,1024], index: 2, kind: output, shape index: {0}]
  %s3 = inlined_call_operand.hbm [shape: f32[16,1024], index: 3, kind: output, shape index: {1}]
  %4 = xla_tuple %s2, %s3
  %s5 = sld [smem:[#allocation0]]
  $region57: #{tpu_custom_call.1} parent=0
    _
  %s7 = ssub.s32 1, %s5
  %s8 = scalar_select 0, %s7, %s5
  $region1: #{tpu_custom_call.1} parent=0
    #allocation2 [shape = 'u8[8192]{0}', space=vmem, size = 0x2000, scoped, tag = 'input window, operand 0, single buffered']
    #allocation3 [shape = 's32[2]{0}', space=sflag, size = 0x8, scoped, tag = 'scoped memory for tpu_custom_call.1']
    #allocation4 [shape = 's32[2]{0}', space=sflag, size = 0x8, scoped, tag = 'scoped memory for tpu_custom_call.1']
    #allocation5 [shape = 'u8[262144]{0}', space=vmem, size = 0x40000, scoped, tag = 'input window, operand 1']
    #allocation6 [shape = 's32[2]{0}', space=sflag, size = 0x8, scoped, tag = 'scoped memory for tpu_custom_call.1']
    #allocation7 [shape = 'u8[262144]{0}', space=vmem, size = 0x40000, scoped, tag = 'output window, operand 0']
    #allocation8 [shape = 'u8[65536]{0}', space=vmem, size = 0x10000, scoped, tag = 'output window, operand 1']
    #allocation9 [shape = 's32[2]{0}', space=sflag, size = 0x8, scoped, tag = 'scoped memory for tpu_custom_call.1']
    %9 = vsyncpa [#allocation3], 0
    %10 = vsyncpa [#allocation6], 0
    %s11 = scalar_lea.sflag [#allocation6], 1
    %12 = vsyncpa %s11, 0
    %13 = vsyncpa [#allocation4], 0
    %s14 = scalar_lea.sflag [#allocation4], 1
    %15 = vsyncpa %s14, 0
    %16 = vsyncpa [#allocation9], 0
    %s17 = scalar_lea.sflag [#allocation9], 1
    %18 = vsyncpa %s17, 0
    loop: start=0, step=1, limit=4
    $region2: #{tpu_custom_call.1} parent=1 // loop_pre_header
      _
    $region3: #{tpu_custom_call.1} parent=1 // loop_header
      %s20 = sphi 0, %s24
      %p21 = scmp.ge.s32.totalorder %s20, 4
      %s28 = sphi 0, %s28
      %s30 = sphi 0, %s28
      %s31 = sphi 0, %s30
      %s45 = sphi 0, %s31
      %s51 = sphi 0, %s53
      %s54 = sphi 0, %s51
      %s55 = sphi 0, %s54
      %s71 = sphi 0, %s55
      %s77 = sphi 0, %s79
      %s80 = sphi 0, %s77
      %s81 = sphi 0, %s80
      %s97 = sphi 0, %s81
      %s103 = sphi 0, %s105
      %s106 = sphi 0, %s103
      %s107 = sphi 0, %s106
      %s123 = sphi 0, %s107
    $region4: #{tpu_custom_call.1} parent=1 // loop_header_branch
      %23 = sbr.rel (%p21) target = $region8
    $region5: #{tpu_custom_call.1} parent=1 // loop_body
      %s25 = ssub.s32 %s20, 1
      %s26 = ssub.s32 %s20, 2
      %s27 = sadd.s32 %s20, 1
      %s29 = sadd.s32 %s28, 1
      %p32 = scmp.eq.s32.totalorder %s20, 1
      %p33 = scmp.ne.s32.totalorder %s28, %s30
      %p34 = scmp.eq.s32.totalorder %s20, 0
      %p35 = por %p33, %p34
      %p36 = scmp.ne.s32.totalorder %s28, %s30
      %p37 = scmp.eq.s32.totalorder %s25, 1
      %p38 = por %p36, %p37
      %p39 = scmp.ne.s32.totalorder %s30, %s31
      %p40 = scmp.eq.s32.totalorder %s25, 0
      %p41 = por %p39, %p40
      %p42 = scmp.ne.s32.totalorder %s30, %s31
      %p43 = scmp.eq.s32.totalorder %s26, 1
      %p44 = por %p42, %p43
      %p46 = scmp.ne.s32.totalorder %s31, %s45
      %p47 = scmp.eq.s32.totalorder %s26, 0
      %p48 = por %p46, %p47
      %s49 = ssub.s32 %s20, %s27
      %p50 = scmp.eq.s32.totalorder %s49, 0
      %s52 = sadd.s32 %s51, 1
      %s53 = scalar_select %p50, %s51, %s52
      %p56 = pneg %p50
      %p57 = scmp.eq.s32.totalorder %s20, 1
      %p58 = por %p56, %p57
      %p59 = scmp.ne.s32.totalorder %s51, %s54
      %p60 = scmp.eq.s32.totalorder %s20, 0
      %p61 = por %p59, %p60
      %p62 = scmp.ne.s32.totalorder %s51, %s54
      %p63 = scmp.eq.s32.totalorder %s25, 1
      %p64 = por %p62, %p63
      %p65 = scmp.ne.s32.totalorder %s54, %s55
      %p66 = scmp.eq.s32.totalorder %s25, 0
      %p67 = por %p65, %p66
      %p68 = scmp.ne.s32.totalorder %s54, %s55
      %p69 = scmp.eq.s32.totalorder %s26, 1
      %p70 = por %p68, %p69
      %p72 = scmp.ne.s32.totalorder %s55, %s71
      %p73 = scmp.eq.s32.totalorder %s26, 0
      %p74 = por %p72, %p73
      %s75 = ssub.s32 %s20, %s27
      %p76 = scmp.eq.s32.totalorder %s75, 0
      %s78 = sadd.s32 %s77, 1
      %s79 = scalar_select %p76, %s77, %s78
      %p82 = pneg %p76
      %p83 = scmp.eq.s32.totalorder %s20, 1
      %p84 = por %p82, %p83
      %p85 = scmp.ne.s32.totalorder %s77, %s80
      %p86 = scmp.eq.s32.totalorder %s20, 0
      %p87 = por %p85, %p86
      %p88 = scmp.ne.s32.totalorder %s77, %s80
      %p89 = scmp.eq.s32.totalorder %s25, 1
      %p90 = por %p88, %p89
      %p91 = scmp.ne.s32.totalorder %s80, %s81
      %p92 = scmp.eq.s32.totalorder %s25, 0
      %p93 = por %p91, %p92
      %p94 = scmp.ne.s32.totalorder %s80, %s81
      %p95 = scmp.eq.s32.totalorder %s26, 1
      %p96 = por %p94, %p95
      %p98 = scmp.ne.s32.totalorder %s81, %s97
      %p99 = scmp.eq.s32.totalorder %s26, 0
      %p100 = por %p98, %p99
      %s101 = ssub.s32 %s20, %s27
      %p102 = scmp.eq.s32.totalorder %s101, 0
      %s104 = sadd.s32 %s103, 1
      %s105 = scalar_select %p102, %s103, %s104
      %p108 = pneg %p102
      %p109 = scmp.eq.s32.totalorder %s20, 1
      %p110 = por %p108, %p109
      %p111 = scmp.ne.s32.totalorder %s103, %s106
      %p112 = scmp.eq.s32.totalorder %s20, 0
      %p113 = por %p111, %p112
      %p114 = scmp.ne.s32.totalorder %s103, %s106
      %p115 = scmp.eq.s32.totalorder %s25, 1
      %p116 = por %p114, %p115
      %p117 = scmp.ne.s32.totalorder %s106, %s107
      %p118 = scmp.eq.s32.totalorder %s25, 0
      %p119 = por %p117, %p118
      %p120 = scmp.ne.s32.totalorder %s106, %s107
      %p121 = scmp.eq.s32.totalorder %s26, 1
      %p122 = por %p120, %p121
      %p124 = scmp.ne.s32.totalorder %s107, %s123
      %p125 = scmp.eq.s32.totalorder %s26, 0
      %p126 = por %p124, %p125
      %p127 = scmp.le.s32.totalorder 1, %s20
      %p128 = scmp.lt.s32.totalorder %s20, 3
      %p129 = pnand %p127, %p128
      %p130 = pneg %p129
      // Predicated region
      $region9: #{tpu_custom_call.1} parent=5 // pred_check
        _
      $region10: #{tpu_custom_call.1} parent=5 // pred_check_branch
        %132 = sbr.rel (%p129) target = $region12
      $region11: #{tpu_custom_call.1} parent=5 // pred_region
        %s133 = ssub.s32 %s20, 1
        // Predicated region
        $region13: #{tpu_custom_call.1} parent=11 // pred_check
          %p134 = pneg %p41
        $region14: #{tpu_custom_call.1} parent=11 // pred_check_branch
          %136 = sbr.rel (%p134) target = $region16
        $region15: #{tpu_custom_call.1} parent=11 // pred_region
          %138 = vsyncadd [#allocation3], 0
          %s139 = sshll.u32 %s0, 4
          %s140 = int_to_ptr.hbm [resolvable:$true] %s139
          %s141 = sshll.u32 [#allocation2], 4
          %s142 = int_to_ptr.vmem [resolvable:$true] %s141
          %147 = dma.hbm_to_vmem [thread:$0]  %s140, 256, %s142, [#allocation3], 128, 128, 8
        $region16: #{tpu_custom_call.1} parent=11 // pred_fallthru
          _
      $region12: #{tpu_custom_call.1} parent=5 // pred_fallthru
        _
      %p148 = scmp.lt.s32.totalorder %s20, 2
      // Predicated region
      $region17: #{tpu_custom_call.1} parent=5 // pred_check
        %p149 = pneg %p148
      $region18: #{tpu_custom_call.1} parent=5 // pred_check_branch
        %151 = sbr.rel (%p149) target = $region20
      $region19: #{tpu_custom_call.1} parent=5 // pred_region
        // Predicated region
        $region21: #{tpu_custom_call.1} parent=19 // pred_check
          %p152 = pneg %p61
        $region22: #{tpu_custom_call.1} parent=19 // pred_check_branch
          %154 = sbr.rel (%p152) target = $region24
        $region23: #{tpu_custom_call.1} parent=19 // pred_region
          %s155 = sand.u32 %s51, 1
          %s156 = scalar_lea.sflag [#allocation6], %s155
          %s157 = sand.u32 %s51, 1
          %s158 = smul.addr %s157, 256
          %s159 = scalar_lea.vmem [#allocation5], %s158
          %s160 = smul.u32 4, %s20
          %162 = vsyncadd %s156, 0
          %s163 = smul.addr %s160, 8
          %s164 = scalar_lea.hbm %s1, %s163
          %s165 = sshll.u32 %s164, 4
          %s166 = int_to_ptr.hbm [resolvable:$true] %s165
          %s167 = sshll.u32 %s159, 4
          %s168 = int_to_ptr.vmem [resolvable:$true] %s167
          %173 = dma.hbm_to_vmem [thread:$0]  %s166, 4096, %s168, %s156, 1024, 512, 32
        $region24: #{tpu_custom_call.1} parent=19 // pred_fallthru
          _
      $region20: #{tpu_custom_call.1} parent=5 // pred_fallthru
        _
      %p174 = scmp.le.s32.totalorder 1, %s20
      %p175 = scmp.lt.s32.totalorder %s20, 3
      %p176 = pnand %p174, %p175
      %p177 = pneg %p176
      // Predicated region
      $region25: #{tpu_custom_call.1} parent=5 // pred_check
        _
      $region26: #{tpu_custom_call.1} parent=5 // pred_check_branch
        %179 = sbr.rel (%p176) target = $region28
      $region27: #{tpu_custom_call.1} parent=5 // pred_region
        %s180 = ssub.s32 %s20, 1
        // Predicated region
        $region29: #{tpu_custom_call.1} parent=27 // pred_check
          %p181 = pneg %p41
        $region30: #{tpu_custom_call.1} parent=27 // pred_check_branch
          %183 = sbr.rel (%p181) target = $region32
        $region31: #{tpu_custom_call.1} parent=27 // pred_region
          %185 = dma.done [#allocation3], 256
        $region32: #{tpu_custom_call.1} parent=27 // pred_fallthru
          _
        %s186 = sand.u32 %s54, 1
        %s187 = scalar_lea.sflag [#allocation6], %s186
        %s188 = sand.u32 %s54, 1
        %s189 = smul.addr %s188, 256
        %s190 = scalar_lea.vmem [#allocation5], %s189
        // Predicated region
        $region33: #{tpu_custom_call.1} parent=27 // pred_check
          %p191 = pneg %p67
        $region34: #{tpu_custom_call.1} parent=27 // pred_check_branch
          %193 = sbr.rel (%p191) target = $region36
        $region35: #{tpu_custom_call.1} parent=27 // pred_region
          %195 = dma.done %s187, 4096
        $region36: #{tpu_custom_call.1} parent=27 // pred_fallthru
          _
        %p196 = pneg %p41
        %p197 = pneg %p38
        %s198 = sand.u32 %s54, 1
        %s199 = scalar_lea.sflag [#allocation6], %s198
        %s200 = sand.u32 %s54, 1
        %s201 = smul.addr %s200, 256
        %s202 = scalar_lea.vmem [#allocation5], %s201
        %p203 = pneg %p67
        %p204 = pneg %p64
        %p205 = pneg %p93
        %p206 = pneg %p90
        %s207 = sand.u32 %s80, 1
        %s208 = scalar_lea.sflag [#allocation4], %s207
        %s209 = sand.u32 %s80, 1
        %s210 = smul.addr %s209, 256
        %s211 = scalar_lea.vmem [#allocation7], %s210
        %p212 = pneg %p119
        %p213 = pneg %p116
        %s214 = sand.u32 %s106, 1
        %s215 = scalar_lea.sflag [#allocation9], %s214
        %s216 = sand.u32 %s106, 1
        %s217 = smul.addr %s216, 64
        %s218 = scalar_lea.vmem [#allocation8], %s217
        %s219 = smul.u32 4, %s25
        %s220 = smul.u32 4, %s25
        %s221 = smul.u32 4, %s25
        %v222 = vld [vmem:[%s190] sm:$0xff]
        %v223 = vld [vmem:[%s190 + $0x8] sm:$0xff]
        %v224 = vld [vmem:[%s190 + $0x10] sm:$0xff]
        %v225 = vld [vmem:[%s190 + $0x18] sm:$0xff]
        %v226 = vld [vmem:[%s190 + $0x20] sm:$0xff]
        %v227 = vld [vmem:[%s190 + $0x28] sm:$0xff]
        %v228 = vld [vmem:[%s190 + $0x30] sm:$0xff]
        %v229 = vld [vmem:[%s190 + $0x38] sm:$0xff]
        %v230 = vld [vmem:[%s190 + $0x40] sm:$0xff]
        %v231 = vld [vmem:[%s190 + $0x48] sm:$0xff]
        %v232 = vld [vmem:[%s190 + $0x50] sm:$0xff]
        %v233 = vld [vmem:[%s190 + $0x58] sm:$0xff]
        %v234 = vld [vmem:[%s190 + $0x60] sm:$0xff]
        %v235 = vld [vmem:[%s190 + $0x68] sm:$0xff]
        %v236 = vld [vmem:[%s190 + $0x70] sm:$0xff]
        %v237 = vld [vmem:[%s190 + $0x78] sm:$0xff]
        %v238 = vld [vmem:[%s190 + $0x80] sm:$0xff]
        %v239 = vld [vmem:[%s190 + $0x88] sm:$0xff]
        %v240 = vld [vmem:[%s190 + $0x90] sm:$0xff]
        %v241 = vld [vmem:[%s190 + $0x98] sm:$0xff]
        %v242 = vld [vmem:[%s190 + $0xa0] sm:$0xff]
        %v243 = vld [vmem:[%s190 + $0xa8] sm:$0xff]
        %v244 = vld [vmem:[%s190 + $0xb0] sm:$0xff]
        %v245 = vld [vmem:[%s190 + $0xb8] sm:$0xff]
        %v246 = vld [vmem:[%s190 + $0xc0] sm:$0xff]
        %v247 = vld [vmem:[%s190 + $0xc8] sm:$0xff]
        %v248 = vld [vmem:[%s190 + $0xd0] sm:$0xff]
        %v249 = vld [vmem:[%s190 + $0xd8] sm:$0xff]
        %v250 = vld [vmem:[%s190 + $0xe0] sm:$0xff]
        %v251 = vld [vmem:[%s190 + $0xe8] sm:$0xff]
        %v252 = vld [vmem:[%s190 + $0xf0] sm:$0xff]
        %v253 = vld [vmem:[%s190 + $0xf8] sm:$0xff]
        %v254 = vld [vmem:[#allocation2] sm:$0xff]
        %v255 = vld [vmem:[#allocation2 + $0x8] sm:$0xff]
        %vm256 = vcmask 523264
        %v258 = vsel %vm256, %v254, 0
        %v261 = vsel %vm256, %v255, 0
        %263 = vmatpush.msra.mxu0 0.0
        %264 = vmatpush.msra.mxu0 0.0
        %265 = vmatpush.msra.mxu0 0.0
        %266 = vmatpush.msra.mxu0 0.0
        %267 = vmatpush.msra.mxu0 0.0
        %268 = vmatpush.msra.mxu0 0.0
        %269 = vmatpush.msra.mxu0 0.0
        %270 = vmatpush.msra.mxu0 0.0
        %271 = vmatpush.msra.mxu0 %v250
        %272 = vmatpush.msra.mxu0 %v246
        %273 = vmatpush.msra.mxu0 %v242
        %274 = vmatpush.msra.mxu0 %v238
        %275 = vmatpush.msra.mxu0 %v234
        %276 = vmatpush.msra.mxu0 %v230
        %277 = vmatpush.msra.mxu0 %v226
        %278 = vmatpush.msra.mxu0 %v222
        %279 = vmatmul.f32.gmra.mxu0 %v258
        %v280 = vpop.f32.mrf.mxu0
        %v281 = vadd.f32 0.0, %v280
        %282 = vmatmul.f32.gmra.mxu0 %v261
        %v283 = vpop.f32.mrf.mxu0
        %v284 = vadd.f32 0.0, %v283
        %285 = vdwg.mxu0
        %286 = vmatpush.msra.mxu0 0.0
        %287 = vmatpush.msra.mxu0 0.0
        %288 = vmatpush.msra.mxu0 0.0
        %289 = vmatpush.msra.mxu0 0.0
        %290 = vmatpush.msra.mxu0 0.0
        %291 = vmatpush.msra.mxu0 0.0
        %292 = vmatpush.msra.mxu0 0.0
        %293 = vmatpush.msra.mxu0 0.0
        %294 = vmatpush.msra.mxu0 %v251
        %295 = vmatpush.msra.mxu0 %v247
        %296 = vmatpush.msra.mxu0 %v243
        %297 = vmatpush.msra.mxu0 %v239
        %298 = vmatpush.msra.mxu0 %v235
        %299 = vmatpush.msra.mxu0 %v231
        %300 = vmatpush.msra.mxu0 %v227
        %301 = vmatpush.msra.mxu0 %v223
        %302 = vmatmul.f32.gmra.mxu0 %v258
        %v303 = vpop.f32.mrf.mxu0
        %v304 = vadd.f32 0.0, %v303
        %305 = vmatmul.f32.gmra.mxu0 %v261
        %v306 = vpop.f32.mrf.mxu0
        %v307 = vadd.f32 0.0, %v306
        %308 = vdwg.mxu0
        %309 = vmatpush.msra.mxu0 0.0
        %310 = vmatpush.msra.mxu0 0.0
        %311 = vmatpush.msra.mxu0 0.0
        %312 = vmatpush.msra.mxu0 0.0
        %313 = vmatpush.msra.mxu0 0.0
        %314 = vmatpush.msra.mxu0 0.0
        %315 = vmatpush.msra.mxu0 0.0
        %316 = vmatpush.msra.mxu0 0.0
        %317 = vmatpush.msra.mxu0 %v252
        %318 = vmatpush.msra.mxu0 %v248
        %319 = vmatpush.msra.mxu0 %v244
        %320 = vmatpush.msra.mxu0 %v240
        %321 = vmatpush.msra.mxu0 %v236
        %322 = vmatpush.msra.mxu0 %v232
        %323 = vmatpush.msra.mxu0 %v228
        %324 = vmatpush.msra.mxu0 %v224
        %325 = vmatmul.f32.gmra.mxu0 %v258
        %v326 = vpop.f32.mrf.mxu0
        %v327 = vadd.f32 0.0, %v326
        %328 = vmatmul.f32.gmra.mxu0 %v261
        %v329 = vpop.f32.mrf.mxu0
        %v330 = vadd.f32 0.0, %v329
        %331 = vdwg.mxu0
        %332 = vmatpush.msra.mxu0 0.0
        %333 = vmatpush.msra.mxu0 0.0
        %334 = vmatpush.msra.mxu0 0.0
        %335 = vmatpush.msra.mxu0 0.0
        %336 = vmatpush.msra.mxu0 0.0
        %337 = vmatpush.msra.mxu0 0.0
        %338 = vmatpush.msra.mxu0 0.0
        %339 = vmatpush.msra.mxu0 0.0
        %340 = vmatpush.msra.mxu0 %v253
        %341 = vmatpush.msra.mxu0 %v249
        %342 = vmatpush.msra.mxu0 %v245
        %343 = vmatpush.msra.mxu0 %v241
        %344 = vmatpush.msra.mxu0 %v237
        %345 = vmatpush.msra.mxu0 %v233
        %346 = vmatpush.msra.mxu0 %v229
        %347 = vmatpush.msra.mxu0 %v225
        %348 = vmatmul.f32.gmra.mxu0 %v258
        %v349 = vpop.f32.mrf.mxu0
        %v350 = vadd.f32 0.0, %v349
        %351 = vmatmul.f32.gmra.mxu0 %v261
        %v352 = vpop.f32.mrf.mxu0
        %v353 = vadd.f32 0.0, %v352
        %354 = vdwg.mxu0
        %v355 = vmul.f32 %v222, %v222
        %v356 = vmul.f32 %v223, %v223
        %v357 = vmul.f32 %v224, %v224
        %v358 = vmul.f32 %v225, %v225
        %v359 = vmul.f32 %v226, %v226
        %v360 = vmul.f32 %v227, %v227
        %v361 = vmul.f32 %v228, %v228
        %v362 = vmul.f32 %v229, %v229
        %v363 = vmul.f32 %v230, %v230
        %v364 = vmul.f32 %v231, %v231
        %v365 = vmul.f32 %v232, %v232
        %v366 = vmul.f32 %v233, %v233
        %v367 = vmul.f32 %v234, %v234
        %v368 = vmul.f32 %v235, %v235
        %v369 = vmul.f32 %v236, %v236
        %v370 = vmul.f32 %v237, %v237
        %v371 = vmul.f32 %v238, %v238
        %v372 = vmul.f32 %v239, %v239
        %v373 = vmul.f32 %v240, %v240
        %v374 = vmul.f32 %v241, %v241
        %v375 = vmul.f32 %v242, %v242
        %v376 = vmul.f32 %v243, %v243
        %v377 = vmul.f32 %v244, %v244
        %v378 = vmul.f32 %v245, %v245
        %v379 = vmul.f32 %v246, %v246
        %v380 = vmul.f32 %v247, %v247
        %v381 = vmul.f32 %v248, %v248
        %v382 = vmul.f32 %v249, %v249
        %v383 = vmul.f32 %v250, %v250
        %v384 = vmul.f32 %v251, %v251
        %v385 = vmul.f32 %v252, %v252
        %v386 = vmul.f32 %v253, %v253
        %v387 = vadd.f32 %v355, %v359
        %v388 = vadd.f32 %v387, %v363
        %v389 = vadd.f32 %v388, %v367
        %v390 = vadd.f32 %v389, %v371
        %v391 = vadd.f32 %v390, %v375
        %v392 = vadd.f32 %v391, %v379
        %v393 = vadd.f32 %v392, %v383
        %v394 = vrot.slane %v393, 4
        %v395 = vadd.f32 %v393, %v394
        %v396 = vrot.slane %v395, 2
        %v397 = vadd.f32 %v395, %v396
        %v398 = vrot.slane %v397, 1
        %v399 = vadd.f32 %v397, %v398
        %v400 = vadd.f32 %v356, %v360
        %v401 = vadd.f32 %v400, %v364
        %v402 = vadd.f32 %v401, %v368
        %v403 = vadd.f32 %v402, %v372
        %v404 = vadd.f32 %v403, %v376
        %v405 = vadd.f32 %v404, %v380
        %v406 = vadd.f32 %v405, %v384
        %v407 = vrot.slane %v406, 4
        %v408 = vadd.f32 %v406, %v407
        %v409 = vrot.slane %v408, 2
        %v410 = vadd.f32 %v408, %v409
        %v411 = vrot.slane %v410, 1
        %v412 = vadd.f32 %v410, %v411
        %v413 = vadd.f32 %v357, %v361
        %v414 = vadd.f32 %v413, %v365
        %v415 = vadd.f32 %v414, %v369
        %v416 = vadd.f32 %v415, %v373
        %v417 = vadd.f32 %v416, %v377
        %v418 = vadd.f32 %v417, %v381
        %v419 = vadd.f32 %v418, %v385
        %v420 = vrot.slane %v419, 4
        %v421 = vadd.f32 %v419, %v420
        %v422 = vrot.slane %v421, 2
        %v423 = vadd.f32 %v421, %v422
        %v424 = vrot.slane %v423, 1
        %v425 = vadd.f32 %v423, %v424
        %v426 = vadd.f32 %v358, %v362
        %v427 = vadd.f32 %v426, %v366
        %v428 = vadd.f32 %v427, %v370
        %v429 = vadd.f32 %v428, %v374
        %v430 = vadd.f32 %v429, %v378
        %v431 = vadd.f32 %v430, %v382
        %v432 = vadd.f32 %v431, %v386
        %v433 = vrot.slane %v432, 4
        %v434 = vadd.f32 %v432, %v433
        %v435 = vrot.slane %v434, 2
        %v436 = vadd.f32 %v434, %v435
        %v437 = vrot.slane %v436, 1
        %v438 = vadd.f32 %v436, %v437
        %v439 = vmax.f32 %v399, 1e-24
        %v440 = vmax.f32 %v412, 1e-24
        %v441 = vmax.f32 %v425, 1e-24
        %v442 = vmax.f32 %v438, 1e-24
        %v443 = vrsqrt.pop %v439
        %v444 = vmul.f32 %v443, %v439
        %v445 = vmul.f32 %v444, %v443
        %v446 = vmul.f32 0.5, %v445
        %v447 = vsub.f32 1.5, %v446
        %v448 = vmul.f32 %v443, %v447
        %vm449 = vweird.f32 %v439
        %vm450 = vweird.f32 %v443
        %vm451 = vmor %vm449, %vm450
        %v452 = vsel %vm451, %v443, %v448
        %v453 = vrsqrt.pop %v440
        %v454 = vmul.f32 %v453, %v440
        %v455 = vmul.f32 %v454, %v453
        %v456 = vmul.f32 0.5, %v455
        %v457 = vsub.f32 1.5, %v456
        %v458 = vmul.f32 %v453, %v457
        %vm459 = vweird.f32 %v440
        %vm460 = vweird.f32 %v453
        %vm461 = vmor %vm459, %vm460
        %v462 = vsel %vm461, %v453, %v458
        %v463 = vrsqrt.pop %v441
        %v464 = vmul.f32 %v463, %v441
        %v465 = vmul.f32 %v464, %v463
        %v466 = vmul.f32 0.5, %v465
        %v467 = vsub.f32 1.5, %v466
        %v468 = vmul.f32 %v463, %v467
        %vm469 = vweird.f32 %v441
        %vm470 = vweird.f32 %v463
        %vm471 = vmor %vm469, %vm470
        %v472 = vsel %vm471, %v463, %v468
        %v473 = vrsqrt.pop %v442
        %v474 = vmul.f32 %v473, %v442
        %v475 = vmul.f32 %v474, %v473
        %v476 = vmul.f32 0.5, %v475
        %v477 = vsub.f32 1.5, %v476
        %v478 = vmul.f32 %v473, %v477
        %vm479 = vweird.f32 %v442
        %vm480 = vweird.f32 %v473
        %vm481 = vmor %vm479, %vm480
        %v482 = vsel %vm481, %v473, %v478
        %v483 = vmul.f32 %v222, %v452
        %v484 = vmul.f32 %v223, %v462
        %v485 = vmul.f32 %v224, %v472
        %v486 = vmul.f32 %v225, %v482
        %v487 = vmul.f32 %v226, %v452
        %v488 = vmul.f32 %v227, %v462
        %v489 = vmul.f32 %v228, %v472
        %v490 = vmul.f32 %v229, %v482
        %v491 = vmul.f32 %v230, %v452
        %v492 = vmul.f32 %v231, %v462
        %v493 = vmul.f32 %v232, %v472
        %v494 = vmul.f32 %v233, %v482
        %v495 = vmul.f32 %v234, %v452
        %v496 = vmul.f32 %v235, %v462
        %v497 = vmul.f32 %v236, %v472
        %v498 = vmul.f32 %v237, %v482
        %v499 = vmul.f32 %v238, %v452
        %v500 = vmul.f32 %v239, %v462
        %v501 = vmul.f32 %v240, %v472
        %v502 = vmul.f32 %v241, %v482
        %v503 = vmul.f32 %v242, %v452
        %v504 = vmul.f32 %v243, %v462
        %v505 = vmul.f32 %v244, %v472
        %v506 = vmul.f32 %v245, %v482
        %v507 = vmul.f32 %v246, %v452
        %v508 = vmul.f32 %v247, %v462
        %v509 = vmul.f32 %v248, %v472
        %v510 = vmul.f32 %v249, %v482
        %v511 = vmul.f32 %v250, %v452
        %v512 = vmul.f32 %v251, %v462
        %v513 = vmul.f32 %v252, %v472
        %v514 = vmul.f32 %v253, %v482
        %515 = vst [vmem:[%s211] sm:$0xff] %v483
        %516 = vst [vmem:[%s211 + $0x8] sm:$0xff] %v484
        %517 = vst [vmem:[%s211 + $0x10] sm:$0xff] %v485
        %518 = vst [vmem:[%s211 + $0x18] sm:$0xff] %v486
        %519 = vst [vmem:[%s211 + $0x20] sm:$0xff] %v487
        %520 = vst [vmem:[%s211 + $0x28] sm:$0xff] %v488
        %521 = vst [vmem:[%s211 + $0x30] sm:$0xff] %v489
        %522 = vst [vmem:[%s211 + $0x38] sm:$0xff] %v490
        %523 = vst [vmem:[%s211 + $0x40] sm:$0xff] %v491
        %524 = vst [vmem:[%s211 + $0x48] sm:$0xff] %v492
        %525 = vst [vmem:[%s211 + $0x50] sm:$0xff] %v493
        %526 = vst [vmem:[%s211 + $0x58] sm:$0xff] %v494
        %527 = vst [vmem:[%s211 + $0x60] sm:$0xff] %v495
        %528 = vst [vmem:[%s211 + $0x68] sm:$0xff] %v496
        %529 = vst [vmem:[%s211 + $0x70] sm:$0xff] %v497
        %530 = vst [vmem:[%s211 + $0x78] sm:$0xff] %v498
        %531 = vst [vmem:[%s211 + $0x80] sm:$0xff] %v499
        %532 = vst [vmem:[%s211 + $0x88] sm:$0xff] %v500
        %533 = vst [vmem:[%s211 + $0x90] sm:$0xff] %v501
        %534 = vst [vmem:[%s211 + $0x98] sm:$0xff] %v502
        %535 = vst [vmem:[%s211 + $0xa0] sm:$0xff] %v503
        %536 = vst [vmem:[%s211 + $0xa8] sm:$0xff] %v504
        %537 = vst [vmem:[%s211 + $0xb0] sm:$0xff] %v505
        %538 = vst [vmem:[%s211 + $0xb8] sm:$0xff] %v506
        %539 = vst [vmem:[%s211 + $0xc0] sm:$0xff] %v507
        %540 = vst [vmem:[%s211 + $0xc8] sm:$0xff] %v508
        %541 = vst [vmem:[%s211 + $0xd0] sm:$0xff] %v509
        %542 = vst [vmem:[%s211 + $0xd8] sm:$0xff] %v510
        %543 = vst [vmem:[%s211 + $0xe0] sm:$0xff] %v511
        %544 = vst [vmem:[%s211 + $0xe8] sm:$0xff] %v512
        %545 = vst [vmem:[%s211 + $0xf0] sm:$0xff] %v513
        %546 = vst [vmem:[%s211 + $0xf8] sm:$0xff] %v514
        %v547 = vmul.f32 %v281, %v452
        %v548 = vmul.f32 %v304, %v462
        %v549 = vmul.f32 %v327, %v472
        %v550 = vmul.f32 %v350, %v482
        %v551 = vmul.f32 %v284, %v452
        %v552 = vmul.f32 %v307, %v462
        %v553 = vmul.f32 %v330, %v472
        %v554 = vmul.f32 %v353, %v482
        %555 = vst [vmem:[%s218] sm:$0xff] %v547
        %556 = vst [vmem:[%s218 + $0x8] sm:$0xff] %v548
        %557 = vst [vmem:[%s218 + $0x10] sm:$0xff] %v549
        %558 = vst [vmem:[%s218 + $0x18] sm:$0xff] %v550
        %559 = vst [vmem:[%s218 + $0x20] sm:$0xff] %v551
        %560 = vst [vmem:[%s218 + $0x28] sm:$0xff] %v552
        %561 = vst [vmem:[%s218 + $0x30] sm:$0xff] %v553
        %562 = vst [vmem:[%s218 + $0x38] sm:$0xff] %v554
        %s563 = sand.u32 %s80, 1
        %s564 = scalar_lea.sflag [#allocation4], %s563
        %s565 = sand.u32 %s80, 1
        %s566 = smul.addr %s565, 256
        %s567 = scalar_lea.vmem [#allocation7], %s566
        %s568 = sand.u32 %s106, 1
        %s569 = scalar_lea.sflag [#allocation9], %s568
        %s570 = sand.u32 %s106, 1
        %s571 = smul.addr %s570, 64
        %s572 = scalar_lea.vmem [#allocation8], %s571
        // Predicated region
        $region37: #{tpu_custom_call.1} parent=27 // pred_check
          %p573 = pneg %p90
        $region38: #{tpu_custom_call.1} parent=27 // pred_check_branch
          %575 = sbr.rel (%p573) target = $region40
        $region39: #{tpu_custom_call.1} parent=27 // pred_region
          %s576 = smul.u32 4, %s25
          %578 = vsyncadd %s564, 0
          %s579 = smul.addr %s576, 8
          %s580 = scalar_lea.hbm %s2, %s579
          %s581 = sshll.u32 %s567, 4
          %s582 = int_to_ptr.vmem [resolvable:$true] %s581
          %s583 = sshll.u32 %s580, 4
          %s584 = int_to_ptr.hbm [resolvable:$true] %s583
          %589 = dma.vmem_to_hbm [thread:$0]  %s582, 4096, %s584, %s564, 512, 1024, 32
        $region40: #{tpu_custom_call.1} parent=27 // pred_fallthru
          _
        // Predicated region
        $region41: #{tpu_custom_call.1} parent=27 // pred_check
          %p590 = pneg %p116
        $region42: #{tpu_custom_call.1} parent=27 // pred_check_branch
          %592 = sbr.rel (%p590) target = $region44
        $region43: #{tpu_custom_call.1} parent=27 // pred_region
          %s593 = smul.u32 4, %s25
          %595 = vsyncadd %s569, 0
          %s596 = smul.addr %s593, 8
          %s597 = scalar_lea.hbm %s3, %s596
          %s598 = sshll.u32 %s572, 4
          %s599 = int_to_ptr.vmem [resolvable:$true] %s598
          %s600 = sshll.u32 %s597, 4
          %s601 = int_to_ptr.hbm [resolvable:$true] %s600
          %606 = dma.vmem_to_hbm [thread:$0]  %s599, 1024, %s601, %s569, 512, 1024, 32
        $region44: #{tpu_custom_call.1} parent=27 // pred_fallthru
          _
      $region28: #{tpu_custom_call.1} parent=5 // pred_fallthru
        _
      %p607 = scmp.le.s32.totalorder 2, %s20
      // Predicated region
      $region45: #{tpu_custom_call.1} parent=5 // pred_check
        %p608 = pneg %p607
      $region46: #{tpu_custom_call.1} parent=5 // pred_check_branch
        %610 = sbr.rel (%p608) target = $region48
      $region47: #{tpu_custom_call.1} parent=5 // pred_region
        %s611 = ssub.s32 %s20, 2
        // Predicated region
        $region49: #{tpu_custom_call.1} parent=47 // pred_check
          %p612 = pneg %p96
        $region50: #{tpu_custom_call.1} parent=47 // pred_check_branch
          %614 = sbr.rel (%p612) target = $region52
        $region51: #{tpu_custom_call.1} parent=47 // pred_region
          %s615 = sand.u32 %s81, 1
          %s616 = scalar_lea.sflag [#allocation4], %s615
          %s617 = sand.u32 %s81, 1
          %s618 = smul.addr %s617, 256
          %s619 = scalar_lea.vmem [#allocation7], %s618
          %621 = dma.done %s616, 4096
        $region52: #{tpu_custom_call.1} parent=47 // pred_fallthru
          _
        // Predicated region
        $region53: #{tpu_custom_call.1} parent=47 // pred_check
          %p622 = pneg %p122
        $region54: #{tpu_custom_call.1} parent=47 // pred_check_branch
          %624 = sbr.rel (%p622) target = $region56
        $region55: #{tpu_custom_call.1} parent=47 // pred_region
          %s625 = sand.u32 %s107, 1
          %s626 = scalar_lea.sflag [#allocation9], %s625
          %s627 = sand.u32 %s107, 1
          %s628 = smul.addr %s627, 64
          %s629 = scalar_lea.vmem [#allocation8], %s628
          %631 = dma.done %s626, 1024
        $region56: #{tpu_custom_call.1} parent=47 // pred_fallthru
          _
      $region48: #{tpu_custom_call.1} parent=5 // pred_fallthru
        _
    $region6: #{tpu_custom_call.1} parent=1 // loop_footer
      %s24 = sadd.s32 1, %s20
    $region7: #{tpu_custom_call.1} parent=1 // loop_footer_branch
      %19 = sbr.rel target = $region3
    $region8: #{tpu_custom_call.1} parent=1 // loop_exit
      _
    %632 = vsyncpa [#allocation3], 1
    %s633 = scalar_lea.sflag [#allocation3], 1
    %634 = vsyncpa %s633, 1
    %635 = vsyncpa [#allocation6], 1
    %s636 = scalar_lea.sflag [#allocation6], 1
    %637 = vsyncpa %s636, 1
    %638 = vsyncpa [#allocation4], 1
    %s639 = scalar_lea.sflag [#allocation4], 1
    %640 = vsyncpa %s639, 1
    %641 = vsyncpa [#allocation9], 1
    %s642 = scalar_lea.sflag [#allocation9], 1
    %643 = vsyncpa %s642, 1

</llo_original>
